<compile_context>
chip_gen: v7x
topology: tpu7x:2x2x1
jax: 0.10.0
libtpu: 0.0.40
codegen_flags: <defaults>
</compile_context>

<pallas_src>
import functools

import jax
import jax.numpy as jnp
from jax.experimental import pallas as pl
from jax.experimental.pallas import tpu as pltpu


# ----------------------------------------------------------------------------
# Per-generation VMEM budget (leave headroom below physical: ~48 MiB on v7x,
# ~96 MiB on v5e/v6e).
# ----------------------------------------------------------------------------
_VMEM_CACHE = [None]


def _vmem_limit_bytes():
    if _VMEM_CACHE[0] is None:
        try:
            cap = int(pltpu.get_tpu_info().vmem_capacity_bytes)
        except Exception:
            cap = 64 * 1024 * 1024
        _VMEM_CACHE[0] = max(32 * 1024 * 1024,
                             min((cap * 3) // 4, 100 * 1024 * 1024))
    return _VMEM_CACHE[0]


def _compiler_params(sem):
    return pltpu.CompilerParams(dimension_semantics=sem,
                                vmem_limit_bytes=_vmem_limit_bytes())


def _pick_lane_tile(n, cap=1024):
    """Largest multiple-of-128 tile <= cap dividing n, else the full extent."""
    for t in (1024, 512, 256, 128):
        if t <= cap and n % t == 0:
            return t
    return n


# ----------------------------------------------------------------------------
# Kernel 1: 1x1 conv (no bias) + eval BatchNorm (folded into the weight).
#   a) per-batch NCHW layout (H*W multiple of 128, lane-dense as is)
#   b) channel-major layout with batch folded into the lane axis (small H*W)
#   c) sequence layout (B, H*W, C) bf16 for encoder-fed levels
# Weights are pre-folded + pre-cast to bf16 on the host; only the activation
# tile is cast in-kernel.
# ----------------------------------------------------------------------------
def _conv_bn_bchw_kernel(x_ref, w_ref, b_ref, o_ref):
    # x: (1, Cin, T) f32   w: (Cout, Cin) bf16   b: (Cout, 1) f32
    x = x_ref[0].astype(jnp.bfloat16)
    o_ref[0] = (jnp.dot(w_ref[...], x, preferred_element_type=jnp.float32)
                + b_ref[...])


def _conv_bn_cm_kernel(x_ref, w_ref, b_ref, o_ref):
    # x: (Cin, T) f32   w: (Cout, Cin) bf16   b: (Cout, 1) f32
    x = x_ref[...].astype(jnp.bfloat16)
    o_ref[...] = (jnp.dot(w_ref[...], x, preferred_element_type=jnp.float32)
                  + b_ref[...])


def conv1x1_bn_nchw(x_nchw, w_co_bf16, shift_f32):
    """1x1 conv + BN, NCHW in -> NCHW f32 out."""
    B, Cin, H, W = x_nchw.shape
    Cout = w_co_bf16.shape[1]
    HW = H * W
    w_oc = w_co_bf16.T                                   # (Cout, Cin) bf16
    b = shift_f32.reshape(Cout, 1)

    if HW % 128 == 0:
        x3 = x_nchw.reshape(B, Cin, HW)
        t = _pick_lane_tile(HW)
        out = pl.pallas_call(
            _conv_bn_bchw_kernel,
            out_shape=jax.ShapeDtypeStruct((B, Cout, HW), jnp.float32),
            grid=(B, HW // t),
            in_specs=[pl.BlockSpec((1, Cin, t), lambda b_, i: (b_, 0, i)),
                      pl.BlockSpec((Cout, Cin), lambda b_, i: (0, 0)),
                      pl.BlockSpec((Cout, 1), lambda b_, i: (0, 0))],
            out_specs=pl.BlockSpec((1, Cout, t), lambda b_, i: (b_, 0, i)),
            compiler_params=_compiler_params(("parallel", "parallel")),
        )(x3, w_oc, b)
        return out.reshape(B, Cout, H, W)

    # Small spatial level: fold batch into the lane axis so the store lane
    # extent is >= 128 (or a single full-extent tile), and the whole level
    # runs in a handful of grid steps.
    N = B * HW
    x2 = x_nchw.reshape(B, Cin, HW).transpose(1, 0, 2).reshape(Cin, N)
    t = N if N % 128 else _pick_lane_tile(N)
    out = pl.pallas_call(
        _conv_bn_cm_kernel,
        out_shape=jax.ShapeDtypeStruct((Cout, N), jnp.float32),
        grid=(N // t,),
        in_specs=[pl.BlockSpec((Cin, t), lambda i: (0, i)),
                  pl.BlockSpec((Cout, Cin), lambda i: (0, 0)),
                  pl.BlockSpec((Cout, 1), lambda i: (0, 0))],
        out_specs=pl.BlockSpec((Cout, t), lambda i: (0, i)),
        compiler_params=_compiler_params(("parallel",)),
    )(x2, w_oc, b)
    return out.reshape(Cout, B, H, W).transpose(1, 0, 2, 3)


def _conv_bn_seq_kernel(x_ref, w_ref, b_ref, o_ref):
    # x: (1, Cin, T) f32   w: (Cin, Cout) bf16   b: (1, Cout) f32   o: bf16
    x = x_ref[0].astype(jnp.bfloat16)
    y = jax.lax.dot_general(x, w_ref[...], (((0,), (0,)), ((), ())),
                            preferred_element_type=jnp.float32)      # (T, Cout)
    o_ref[0] = (y + b_ref[...]).astype(o_ref.dtype)


def conv1x1_bn_seq(x_nchw, w_co_bf16, shift_f32):
    """1x1 conv + BN emitting the (B, H*W, C) bf16 sequence for the encoder."""
    B, Cin, H, W = x_nchw.shape
    Cout = w_co_bf16.shape[1]
    HW = H * W
    x3 = x_nchw.reshape(B, Cin, HW)
    b = shift_f32.reshape(1, Cout)
    t = _pick_lane_tile(HW)
    return pl.pallas_call(
        _conv_bn_seq_kernel,
        out_shape=jax.ShapeDtypeStruct((B, HW, Cout), jnp.bfloat16),
        grid=(B, HW // t),
        in_specs=[pl.BlockSpec((1, Cin, t), lambda b_, i: (b_, 0, i)),
                  pl.BlockSpec((Cin, Cout), lambda b_, i: (0, 0)),
                  pl.BlockSpec((1, Cout), lambda b_, i: (0, 0))],
        out_specs=pl.BlockSpec((1, t, Cout), lambda b_, i: (b_, i, 0)),
        compiler_params=_compiler_params(("parallel", "parallel")),
    )(x3, w_co_bf16, b)


# ----------------------------------------------------------------------------
# Kernel 2: full TransformerEncoderLayer (MHA + FFN + 2x LayerNorm), dropout=0.
# Grid (B, S//tq) with ("parallel", "arbitrary") semantics: K/V are projected
# once per batch element (qi == 0) into persistent VMEM scratch; q-tiles are
# delivered by BlockSpec; bf16 MXU matmuls with f32 accumulation.
# ----------------------------------------------------------------------------
def _layer_norm(x, g, b, eps=1e-5):
    mu = jnp.mean(x, axis=-1, keepdims=True)
    var = jnp.mean((x - mu) * (x - mu), axis=-1, keepdims=True)
    return (x - mu) * jax.lax.rsqrt(var + eps) * g + b


def _gelu(x):
    # TODO(synk): PyTorch F.gelu defaults to exact erf-GELU; the tanh
    # approximation is used for robust in-kernel TPU (EUP) lowering.
    c = 0.7978845608028654  # sqrt(2/pi)
    return 0.5 * x * (1.0 + jnp.tanh(c * (x + 0.044715 * x * x * x)))


def _encoder_layer_kernel(*refs, nhead, full_q):
    if full_q:
        (src_q_ref, pos_q_ref, wqkv_ref, bqkv_ref, wo_ref, w1_ref, b1_ref,
         w2_ref, dvec_ref, out_ref, k_scr, v_scr) = refs
        src_full_ref, pos_full_ref = src_q_ref, pos_q_ref
    else:
        (src_q_ref, pos_q_ref, src_full_ref, pos_full_ref, wqkv_ref, bqkv_ref,
         wo_ref, w1_ref, b1_ref, w2_ref, dvec_ref, out_ref, k_scr, v_scr) = refs

    D = src_q_ref.shape[2]
    dh = D // nhead
    scale = 1.0 / float(dh) ** 0.5

    # K/V (and src+pos) are identical for every q-tile of a batch element:
    # compute once at qi == 0 into VMEM scratch that persists across qi.
    @pl.when(pl.program_id(1) == 0)
    def _():
        src_full = src_full_ref[0].astype(jnp.bfloat16)               # (S, D)
        kv_in = (src_full + pos_full_ref[0].astype(jnp.bfloat16)
                 ).astype(jnp.bfloat16)
        k = jnp.dot(kv_in, wqkv_ref[1],
                    preferred_element_type=jnp.float32) + bqkv_ref[1]
        v = jnp.dot(src_full, wqkv_ref[2],
                    preferred_element_type=jnp.float32) + bqkv_ref[2]
        k_scr[...] = k.astype(jnp.bfloat16)
        v_scr[...] = v.astype(jnp.bfloat16)

    src_q = src_q_ref[0].astype(jnp.float32)            # (tq, D) f32 residual
    q_in = (src_q_ref[0].astype(jnp.bfloat16)
            + pos_q_ref[0].astype(jnp.bfloat16)).astype(jnp.bfloat16)
    q = jnp.dot(q_in, wqkv_ref[0],
                preferred_element_type=jnp.float32) + bqkv_ref[0]
    q_b = (q * scale).astype(jnp.bfloat16)
    k_b = k_scr[...]
    v_b = v_scr[...]

    # Per-head scores / softmax / p@v; each head output is folded straight
    # into the output projection (no concatenate / lane shuffles).
    acc = None
    for h in range(nhead):
        sl = slice(h * dh, (h + 1) * dh)
        s = jax.lax.dot_general(q_b[:, sl], k_b[:, sl],
                                (((1,), (1,)), ((), ())),
                                preferred_element_type=jnp.float32)    # (tq, S)
        s = s - jnp.max(s, axis=-1, keepdims=True)
        p = jnp.exp(s)
        p = p * pl.reciprocal(jnp.sum(p, axis=-1, keepdims=True), approx=True)
        o_h = jnp.dot(p.astype(jnp.bfloat16), v_b[:, sl],
                      preferred_element_type=jnp.float32)              # (tq, dh)
        c = jnp.dot(o_h.astype(jnp.bfloat16), wo_ref[sl, :],
                    preferred_element_type=jnp.float32)                # (tq, D)
        acc = c if acc is None else acc + c
    attn = acc + dvec_ref[0]                                           # + b_o

    x = _layer_norm(src_q + attn, dvec_ref[2], dvec_ref[3])            # norm1
    h1 = jnp.dot(x.astype(jnp.bfloat16), w1_ref[...],
                 preferred_element_type=jnp.float32) + b1_ref[...]
    h2 = jnp.dot(_gelu(h1).astype(jnp.bfloat16), w2_ref[...],
                 preferred_element_type=jnp.float32) + dvec_ref[1]     # + b_2
    out_ref[0] = _layer_norm(x + h2, dvec_ref[4], dvec_ref[5]
                             ).astype(out_ref.dtype)                   # norm2


def _pick_q_tile(S, D, F, vmem_limit):
    """Prefer tq == S; only q-tile when the VMEM budget demands it."""
    def est(tq):
        w = 2 * (4 * D * D + 2 * D * F)                   # bf16 weights
        fixed = 2 * 2 * (S * D * 2) + 2 * (S * D * 2)     # full-S src/pos + K/V scratch
        qio = 2 * 2 * (tq * D * 2) + 2 * (tq * D * 4)     # q-tile in (dbuf) + out (dbuf)
        live = tq * (8 * D + 2 * F + 2 * S) * 4           # rough f32 temporaries
        return w + fixed + qio + live
    tq = S
    while (tq > 256 and tq % 2 == 0 and (tq // 2) % 8 == 0
           and est(tq) > 0.7 * vmem_limit):
        tq //= 2
    return tq


def encoder_layer(x, pos_b16, p, nhead, *, last):
    """One fused TransformerEncoderLayer.  Output is bf16 (B,S,D), except the
    last layer which emits f32 for the NCHW feature map."""
    x = x.astype(jnp.bfloat16)
    B, S, D = x.shape
    F = p['w1'].shape[1]
    tq = _pick_q_tile(S, D, F, _vmem_limit_bytes())
    nq = S // tq
    full_q = (tq == S)

    weights = [p['wqkv'], p['bqkv'], p['wo'], p['w1'], p['b1'], p['w2'],
               p['dvec']]

    def const_spec(a):
        nd = a.ndim
        return pl.BlockSpec(a.shape, lambda b, qi, _nd=nd: (0,) * _nd)

    in_specs = [pl.BlockSpec((1, tq, D), lambda b, qi: (b, qi, 0)),
                pl.BlockSpec((1, tq, D), lambda b, qi: (0, qi, 0))]
    args = [x, pos_b16]
    if not full_q:
        # Full-sequence views for the K/V path; the constant block index per b
        # means Pallas only re-DMAs them when b changes.
        in_specs += [pl.BlockSpec((1, S, D), lambda b, qi: (b, 0, 0)),
                     pl.BlockSpec((1, S, D), lambda b, qi: (0, 0, 0))]
        args += [x, pos_b16]
    in_specs += [const_spec(a) for a in weights]
    args += weights

    out_dtype = jnp.float32 if last else jnp.bfloat16
    # TODO(synk): optionally emit the last layer directly as (B, D, S) via an
    # in-kernel XLU transpose to skip the post-hoc XLA transpose pass.
    return pl.pallas_call(
        functools.partial(_encoder_layer_kernel, nhead=nhead, full_q=full_q),
        out_shape=jax.ShapeDtypeStruct((B, S, D), out_dtype),
        grid=(B, nq),
        in_specs=in_specs,
        out_specs=pl.BlockSpec((1, tq, D), lambda b, qi: (b, qi, 0)),
        scratch_shapes=[pltpu.VMEM((S, D), jnp.bfloat16),   # K (persistent)
                        pltpu.VMEM((S, D), jnp.bfloat16)],  # V (persistent)
        compiler_params=_compiler_params(("parallel", "arbitrary")),
    )(*args)


# ----------------------------------------------------------------------------
# Glue: positional embedding, parameter init, full forward
# ----------------------------------------------------------------------------
def build_2d_sincos_position_embedding(w, h, embed_dim, temperature=10000.0):
    # Matches the reference module exactly (including its w-major flatten).
    grid_w = jnp.arange(w, dtype=jnp.float32)
    grid_h = jnp.arange(h, dtype=jnp.float32)
    gw, gh = jnp.meshgrid(grid_w, grid_h, indexing='ij')
    assert embed_dim % 4 == 0
    pos_dim = embed_dim // 4
    omega = jnp.arange(pos_dim, dtype=jnp.float32) / pos_dim
    omega = 1.0 / (temperature ** omega)
    out_w = gw.reshape(-1)[:, None] * omega[None]
    out_h = gh.reshape(-1)[:, None] * omega[None]
    return jnp.concatenate(
        [jnp.sin(out_w), jnp.cos(out_w), jnp.sin(out_h), jnp.cos(out_h)],
        axis=1)[None]                                    # (1, w*h, embed_dim)


def init_params(key, in_channels, hidden_dim, nhead, dim_feedforward,
                use_encoder_idx, num_encoder_layers):
    eps = 1e-5
    D, F = hidden_dim, dim_feedforward
    keys = iter(jax.random.split(key, 256))
    params = {'input_proj': [], 'encoder': []}

    for c in in_channels:
        # Conv2d kaiming_normal_(fan_out, relu): std = sqrt(2 / fan_out)
        w = (jax.random.normal(next(keys), (c, D), jnp.float32)
             * (2.0 / D) ** 0.5)
        gamma = jnp.ones((D,), jnp.float32)
        beta = jnp.zeros((D,), jnp.float32)
        mean = jnp.zeros((D,), jnp.float32)
        var = jnp.ones((D,), jnp.float32)
        scale = gamma / jnp.sqrt(var + eps)
        shift = beta - mean * scale
        params['input_proj'].append({
            'w': (w * scale[None, :]).astype(jnp.bfloat16),  # BN folded, bf16
            'shift': shift.astype(jnp.float32)})

    def lin(k, fan_in, shape):
        return jax.random.normal(k, shape, jnp.float32) * (1.0 / fan_in) ** 0.5

    for _ in use_encoder_idx:
        layers = []
        for _ in range(num_encoder_layers):
            wq = lin(next(keys), D, (D, D))
            wk = lin(next(keys), D, (D, D))
            wv = lin(next(keys), D, (D, D))
            layers.append({
                'wqkv': jnp.stack([wq, wk, wv]).astype(jnp.bfloat16),  # (3,D,D)
                'bqkv': jnp.zeros((3, 1, D), jnp.float32),
                'wo': lin(next(keys), D, (D, D)).astype(jnp.bfloat16),
                'w1': lin(next(keys), D, (D, F)).astype(jnp.bfloat16),
                'b1': jnp.zeros((1, F), jnp.float32),
                'w2': lin(next(keys), F, (F, D)).astype(jnp.bfloat16),
                # dvec packs [bo, b2, ln1_g, ln1_b, ln2_g, ln2_b]
                'dvec': jnp.stack([jnp.zeros((1, D)), jnp.zeros((1, D)),
                                   jnp.ones((1, D)), jnp.zeros((1, D)),
                                   jnp.ones((1, D)), jnp.zeros((1, D))]
                                  ).astype(jnp.float32),               # (6,1,D)
            })
        params['encoder'].append(layers)
    return params


def hybrid_hsfpn_encoder_forward(feats, params, *, hidden_dim, nhead,
                                 use_encoder_idx, pe_temperature=10000.0):
    assert len(feats) == len(params['input_proj'])
    enc_set = set(use_encoder_idx)
    proj_feats = [None] * len(feats)
    seq_feats = {}
    # TODO(synk): the three input_proj levels could be fused into a single
    # pallas_call with a per-level scalar-prefetch table to amortize launches.
    for i, (f, p) in enumerate(zip(feats, params['input_proj'])):
        if i in enc_set:
            # conv emits (B, H*W, C) bf16 directly: no NCHW round trip
            seq_feats[i] = (conv1x1_bn_seq(f, p['w'], p['shift']),
                            f.shape[2], f.shape[3])
        else:
            proj_feats[i] = conv1x1_bn_nchw(f, p['w'], p['shift'])

    for enc_i, idx in enumerate(use_encoder_idx):
        x, H, W = seq_feats[idx]
        B = x.shape[0]
        pos = build_2d_sincos_position_embedding(
            W, H, hidden_dim, pe_temperature).astype(jnp.bfloat16)
        layers = params['encoder'][enc_i]
        for li, layer_p in enumerate(layers):
            x = encoder_layer(x, pos, layer_p, nhead,
                              last=(li == len(layers) - 1))
        proj_feats[idx] = x.astype(jnp.float32).transpose(0, 2, 1).reshape(
            B, hidden_dim, H, W)

    # TODO(synk): HSFPN class definition is not provided in the reference
    # module; returning the projected/encoded pyramid unchanged.
    return proj_feats


if __name__ == "__main__":
    B = 2
    in_channels = [16, 32, 64]
    feat_strides = [8, 16, 32]
    hidden_dim = 32
    nhead = 4
    dim_feedforward = 64
    use_encoder_idx = [2]
    num_encoder_layers = 1
    image_size = 128  # -> spatial sizes 16, 8, 4

    key = jax.random.PRNGKey(0)
    kf, kp = jax.random.split(key)
    fkeys = jax.random.split(kf, len(in_channels))
    feats = [
        jax.random.normal(fkeys[i], (B, c, image_size // s, image_size // s),
                          jnp.float32)
        for i, (c, s) in enumerate(zip(in_channels, feat_strides))
    ]

    params = init_params(kp, in_channels, hidden_dim, nhead, dim_feedforward,
                         use_encoder_idx, num_encoder_layers)

    outs = hybrid_hsfpn_encoder_forward(
        feats, params, hidden_dim=hidden_dim, nhead=nhead,
        use_encoder_idx=use_encoder_idx, pe_temperature=10000.0)

    for o in outs:
        jax.block_until_ready(o)
    assert all(o.shape == (B, hidden_dim, f.shape[2], f.shape[3])
               for o, f in zip(outs, feats))
    assert all(bool(jnp.all(jnp.isfinite(o))) for o in outs)
    print("KERNEL_OK")
</pallas_src>

<mosaic_0001>
module attributes {stable_mosaic.version = 11 : i64} {
  func.func @_conv_bn_bchw_kernel(%arg0: i32, %arg1: i32, %arg2: memref<1x16x256xf32, #tpu.memory_space<vmem>>, %arg3: memref<32x16xbf16, #tpu.memory_space<vmem>>, %arg4: memref<32x1xf32, #tpu.memory_space<vmem>>, %arg5: memref<1x32x256xf32, #tpu.memory_space<vmem>>) attributes {dimension_semantics = [#tpu.dimension_semantics<parallel>, #tpu.dimension_semantics<parallel>], iteration_bounds = array<i64: 2, 1>, scalar_prefetch = 0 : i64, scratch_operands = 0 : i64, tpu.core_type = #tpu.core_type<tc>, window_params = [{transform_indices = @transform_0, window_bounds = array<i64: 1, 16, 256>}, {pipeline_mode = #tpu.pipeline_mode<synchronous>, transform_indices = @transform_1, window_bounds = array<i64: 32, 16>}, {pipeline_mode = #tpu.pipeline_mode<synchronous>, transform_indices = @transform_2, window_bounds = array<i64: 32, 1>}, {transform_indices = @transform_3, window_bounds = array<i64: 1, 32, 256>}]} {
    %c0 = arith.constant 0 : index
    %c0_0 = arith.constant 0 : index
    %c0_1 = arith.constant 0 : index
    %0 = vector.load %arg2[%c0, %c0_0, %c0_1] : memref<1x16x256xf32, #tpu.memory_space<vmem>>, vector<1x16x256xf32>
    %1 = vector.shape_cast %0 : vector<1x16x256xf32> to vector<16x256xf32>
    %2 = arith.truncf %1 : vector<16x256xf32> to vector<16x256xbf16>
    %c0_2 = arith.constant 0 : index
    %c0_3 = arith.constant 0 : index
    %3 = vector.load %arg3[%c0_2, %c0_3] : memref<32x16xbf16, #tpu.memory_space<vmem>>, vector<32x16xbf16>
    %cst = arith.constant dense<0.000000e+00> : vector<32x256xf32>
    %4 = tpu.matmul %3, %2, %cst {dimension_numbers = #tpu.dot_dimension_numbers<[1], [0], [0], [1], [0, 0, 1, 1], [], []>} : vector<32x16xbf16>, vector<16x256xbf16>, vector<32x256xf32> -> vector<32x256xf32>
    %c0_4 = arith.constant 0 : index
    %c0_5 = arith.constant 0 : index
    %5 = vector.load %arg4[%c0_4, %c0_5] : memref<32x1xf32, #tpu.memory_space<vmem>>, vector<32x1xf32>
    %6 = vector.broadcast %5 : vector<32x1xf32> to vector<32x256xf32>
    %7 = arith.addf %4, %6 : vector<32x256xf32>
    %c0_6 = arith.constant 0 : index
    %c0_7 = arith.constant 0 : index
    %c0_8 = arith.constant 0 : index
    %8 = vector.load %arg5[%c0_6, %c0_7, %c0_8] : memref<1x32x256xf32, #tpu.memory_space<vmem>>, vector<1x32x256xf32>
    %9 = vector.shape_cast %8 : vector<1x32x256xf32> to vector<32x256xf32>
    %10 = vector.shape_cast %7 : vector<32x256xf32> to vector<1x32x256xf32>
    tpu.vector_store %arg5[%c0_6, %c0_7, %c0_8], %10 {strides = array<i32>} : memref<1x32x256xf32, #tpu.memory_space<vmem>>, vector<1x32x256xf32>,
    return
  }
  func.func @transform_0(%arg0: i32, %arg1: i32) -> (i32, i32, i32) {
    %c0_i32 = arith.constant 0 : i32
    %c0_i32_0 = arith.constant 0 : i32
    return %arg0, %c0_i32, %arg1 : i32, i32, i32
  }
  func.func @transform_1(%arg0: i32, %arg1: i32) -> (i32, i32) {
    %c0_i32 = arith.constant 0 : i32
    %c0_i32_0 = arith.constant 0 : i32
    %c0_i32_1 = arith.constant 0 : i32
    return %c0_i32, %c0_i32_0 : i32, i32
  }
  func.func @transform_2(%arg0: i32, %arg1: i32) -> (i32, i32) {
    %c0_i32 = arith.constant 0 : i32
    %c0_i32_0 = arith.constant 0 : i32
    %c0_i32_1 = arith.constant 0 : i32
    return %c0_i32, %c0_i32_0 : i32, i32
  }
  func.func @transform_3(%arg0: i32, %arg1: i32) -> (i32, i32, i32) {
    %c0_i32 = arith.constant 0 : i32
    %c0_i32_0 = arith.constant 0 : i32
    return %arg0, %c0_i32, %arg1 : i32, i32, i32
  }
}

</mosaic_0001>

<llo_original>
// kernel: tpu_custom_call.1
$region0: #{tpu_custom_call.1}
  #allocation0 [shape = 'u32[]', space=smem, size = 0x4, offset = 0x4, fixed_abs, tag = 'smem constant byte address 0x4 - core index']
  #allocation1 [shape = 'u32[144,128]{1,0:T(1,128)}', space=vmem, size = 0x12000, scoped, tag = 'internal scratch']
  %s0 = inlined_call_operand.hbm [shape: f32[2,16,256], index: 0, kind: input, shape index: {}]
  %s1 = inlined_call_operand.vmem [shape: bf16[32,16], index: 1, kind: input, shape index: {}]
  %s2 = inlined_call_operand.vmem [shape: f32[32,1], index: 2, kind: input, shape index: {}]
  %s3 = inlined_call_operand.hbm [shape: f32[2,32,256], index: 3, kind: output, shape index: {}]
  %s4 = sld [smem:[#allocation0]]
  $region49: #{tpu_custom_call.1} parent=0
    _
  %s6 = ssub.s32 1, %s4
  %s7 = scalar_select 0, %s6, %s4
  $region1: #{tpu_custom_call.1} parent=0
    #allocation2 [shape = 'u8[32768]{0}', space=vmem, size = 0x8000, scoped, tag = 'input window, operand 0']
    #allocation3 [shape = 's32[2]{0}', space=sflag, size = 0x8, scoped, tag = 'scoped memory for tpu_custom_call.1']
    #allocation4 [shape = 's32[2]{0}', space=sflag, size = 0x8, scoped, tag = 'scoped memory for tpu_custom_call.1']
    #allocation5 [shape = 'u8[65536]{0}', space=vmem, size = 0x10000, scoped, tag = 'output window, operand 0']
    %8 = vsyncpa [#allocation3], 0
    %s9 = scalar_lea.sflag [#allocation3], 1
    %10 = vsyncpa %s9, 0
    %11 = vsyncpa [#allocation4], 0
    %s12 = scalar_lea.sflag [#allocation4], 1
    %13 = vsyncpa %s12, 0
    loop: start=0, step=1, limit=4
    $region2: #{tpu_custom_call.1} parent=1 // loop_pre_header
      _
    $region3: #{tpu_custom_call.1} parent=1 // loop_header
      %s15 = sphi 0, %s19
      %p16 = scmp.ge.s32.totalorder %s15, 4
      %s22 = sphi 0, %s34
      %s23 = sphi 0, %s30
      %s24 = sphi 0, %s22
      %s25 = sphi 0, %s23
      %s26 = sphi 0, %s24
      %s27 = sphi 0, %s25
      %s39 = sphi 0, %s41
      %s42 = sphi 0, %s39
      %s43 = sphi 0, %s42
      %s59 = sphi 0, %s43
      %s63 = sphi 0, %s63
      %s65 = sphi 0, %s63
      %s66 = sphi 0, %s65
      %s80 = sphi 0, %s66
      %s84 = sphi 0, %s84
      %s86 = sphi 0, %s84
      %s87 = sphi 0, %s86
      %s101 = sphi 0, %s87
      %s109 = sphi 0, %s111
      %s112 = sphi 0, %s109
      %s113 = sphi 0, %s112
      %s129 = sphi 0, %s113
    $region4: #{tpu_custom_call.1} parent=1 // loop_header_branch
      %18 = sbr.rel (%p16) target = $region8
    $region5: #{tpu_custom_call.1} parent=1 // loop_body
      %s20 = ssub.s32 %s15, 1
      %s21 = ssub.s32 %s15, 2
      %s28 = sadd.s32 1, %s23
      %p29 = scmp.ge.s32.totalorder %s28, 1
      %s30 = scalar_select %p29, 0, %s28
      %s31 = sadd.s32 1, %s22
      %s32 = scalar_select %p29, %s31, %s22
      %p33 = scmp.ge.s32.totalorder %s32, 2
      %s34 = scalar_select %p33, 0, %s32
      %s35 = ssub.s32 %s22, %s34
      %s36 = ssub.s32 %s23, %s30
      %s37 = sor.u32 %s35, %s36
      %p38 = scmp.eq.s32.totalorder %s37, 0
      %s40 = sadd.s32 %s39, 1
      %s41 = scalar_select %p38, %s39, %s40
      %p44 = pneg %p38
      %p45 = scmp.eq.s32.totalorder %s15, 1
      %p46 = por %p44, %p45
      %p47 = scmp.ne.s32.totalorder %s39, %s42
      %p48 = scmp.eq.s32.totalorder %s15, 0
      %p49 = por %p47, %p48
      %p50 = scmp.ne.s32.totalorder %s39, %s42
      %p51 = scmp.eq.s32.totalorder %s20, 1
      %p52 = por %p50, %p51
      %p53 = scmp.ne.s32.totalorder %s42, %s43
      %p54 = scmp.eq.s32.totalorder %s20, 0
      %p55 = por %p53, %p54
      %p56 = scmp.ne.s32.totalorder %s42, %s43
      %p57 = scmp.eq.s32.totalorder %s21, 1
      %p58 = por %p56, %p57
      %p60 = scmp.ne.s32.totalorder %s43, %s59
      %p61 = scmp.eq.s32.totalorder %s21, 0
      %p62 = por %p60, %p61
      %s64 = sadd.s32 %s63, 1
      %p67 = scmp.eq.s32.totalorder %s15, 1
      %p68 = scmp.ne.s32.totalorder %s63, %s65
      %p69 = scmp.eq.s32.totalorder %s15, 0
      %p70 = por %p68, %p69
      %p71 = scmp.ne.s32.totalorder %s63, %s65
      %p72 = scmp.eq.s32.totalorder %s20, 1
      %p73 = por %p71, %p72
      %p74 = scmp.ne.s32.totalorder %s65, %s66
      %p75 = scmp.eq.s32.totalorder %s20, 0
      %p76 = por %p74, %p75
      %p77 = scmp.ne.s32.totalorder %s65, %s66
      %p78 = scmp.eq.s32.totalorder %s21, 1
      %p79 = por %p77, %p78
      %p81 = scmp.ne.s32.totalorder %s66, %s80
      %p82 = scmp.eq.s32.totalorder %s21, 0
      %p83 = por %p81, %p82
      %s85 = sadd.s32 %s84, 1
      %p88 = scmp.eq.s32.totalorder %s15, 1
      %p89 = scmp.ne.s32.totalorder %s84, %s86
      %p90 = scmp.eq.s32.totalorder %s15, 0
      %p91 = por %p89, %p90
      %p92 = scmp.ne.s32.totalorder %s84, %s86
      %p93 = scmp.eq.s32.totalorder %s20, 1
      %p94 = por %p92, %p93
      %p95 = scmp.ne.s32.totalorder %s86, %s87
      %p96 = scmp.eq.s32.totalorder %s20, 0
      %p97 = por %p95, %p96
      %p98 = scmp.ne.s32.totalorder %s86, %s87
      %p99 = scmp.eq.s32.totalorder %s21, 1
      %p100 = por %p98, %p99
      %p102 = scmp.ne.s32.totalorder %s87, %s101
      %p103 = scmp.eq.s32.totalorder %s21, 0
      %p104 = por %p102, %p103
      %s105 = ssub.s32 %s22, %s34
      %s106 = ssub.s32 %s23, %s30
      %s107 = sor.u32 %s105, %s106
      %p108 = scmp.eq.s32.totalorder %s107, 0
      %s110 = sadd.s32 %s109, 1
      %s111 = scalar_select %p108, %s109, %s110
      %p114 = pneg %p108
      %p115 = scmp.eq.s32.totalorder %s15, 1
      %p116 = por %p114, %p115
      %p117 = scmp.ne.s32.totalorder %s109, %s112
      %p118 = scmp.eq.s32.totalorder %s15, 0
      %p119 = por %p117, %p118
      %p120 = scmp.ne.s32.totalorder %s109, %s112
      %p121 = scmp.eq.s32.totalorder %s20, 1
      %p122 = por %p120, %p121
      %p123 = scmp.ne.s32.totalorder %s112, %s113
      %p124 = scmp.eq.s32.totalorder %s20, 0
      %p125 = por %p123, %p124
      %p126 = scmp.ne.s32.totalorder %s112, %s113
      %p127 = scmp.eq.s32.totalorder %s21, 1
      %p128 = por %p126, %p127
      %p130 = scmp.ne.s32.totalorder %s113, %s129
      %p131 = scmp.eq.s32.totalorder %s21, 0
      %p132 = por %p130, %p131
      %p133 = scmp.le.s32.totalorder 1, %s15
      %p134 = scmp.lt.s32.totalorder %s15, 3
      %p135 = pnand %p133, %p134
      %p136 = pneg %p135
      // Predicated region
      $region9: #{tpu_custom_call.1} parent=5 // pred_check
        _
      $region10: #{tpu_custom_call.1} parent=5 // pred_check_branch
        %138 = sbr.rel (%p135) target = $region12
      $region11: #{tpu_custom_call.1} parent=5 // pred_region
        %s139 = ssub.s32 %s15, 1
        // Predicated region
        $region13: #{tpu_custom_call.1} parent=11 // pred_check
          %p140 = pneg %p76
        $region14: #{tpu_custom_call.1} parent=11 // pred_check_branch
          %142 = sbr.rel (%p140) target = $region16
        $region15: #{tpu_custom_call.1} parent=11 // pred_region
          _
        $region16: #{tpu_custom_call.1} parent=11 // pred_fallthru
          _
        // Predicated region
        $region17: #{tpu_custom_call.1} parent=11 // pred_check
          %p143 = pneg %p97
        $region18: #{tpu_custom_call.1} parent=11 // pred_check_branch
          %145 = sbr.rel (%p143) target = $region20
        $region19: #{tpu_custom_call.1} parent=11 // pred_region
          _
        $region20: #{tpu_custom_call.1} parent=11 // pred_fallthru
          _
      $region12: #{tpu_custom_call.1} parent=5 // pred_fallthru
        _
      %p146 = scmp.lt.s32.totalorder %s15, 2
      // Predicated region
      $region21: #{tpu_custom_call.1} parent=5 // pred_check
        %p147 = pneg %p146
      $region22: #{tpu_custom_call.1} parent=5 // pred_check_branch
        %149 = sbr.rel (%p147) target = $region24
      $region23: #{tpu_custom_call.1} parent=5 // pred_region
        // Predicated region
        $region25: #{tpu_custom_call.1} parent=23 // pred_check
          %p150 = pneg %p49
        $region26: #{tpu_custom_call.1} parent=23 // pred_check_branch
          %152 = sbr.rel (%p150) target = $region28
        $region27: #{tpu_custom_call.1} parent=23 // pred_region
          %s153 = sand.u32 %s39, 1
          %s154 = scalar_lea.sflag [#allocation3], %s153
          %s155 = sand.u32 %s39, 1
          %s156 = smul.addr %s155, 32
          %s157 = scalar_lea.vmem [#allocation2], %s156
          %s158 = smul.u32 2, %s23
          %s160 = ssub.s32 512, 512
          %161 = vsyncadd %s154, %s160
          %s162 = smul.addr %s22, 4
          %s163 = sadd.s32 %s158, %s162
          %s164 = smul.addr %s163, 128
          %s165 = scalar_lea.hbm %s0, %s164
          %s166 = sshll.u32 %s157, 4
          %s167 = int_to_ptr.vmem [resolvable:$true] %s166
          %172 = dma.hbm_to_vmem [thread:$0]  %s165, 512, %s167, %s154, 256, 256, 16
        $region28: #{tpu_custom_call.1} parent=23 // pred_fallthru
          _
      $region24: #{tpu_custom_call.1} parent=5 // pred_fallthru
        _
      %p173 = scmp.le.s32.totalorder 1, %s15
      %p174 = scmp.lt.s32.totalorder %s15, 3
      %p175 = pnand %p173, %p174
      %p176 = pneg %p175
      // Predicated region
      $region29: #{tpu_custom_call.1} parent=5 // pred_check
        _
      $region30: #{tpu_custom_call.1} parent=5 // pred_check_branch
        %178 = sbr.rel (%p175) target = $region32
      $region31: #{tpu_custom_call.1} parent=5 // pred_region
        %s179 = ssub.s32 %s15, 1
        %s180 = sand.u32 %s42, 1
        %s181 = scalar_lea.sflag [#allocation3], %s180
        %s182 = sand.u32 %s42, 1
        %s183 = smul.addr %s182, 32
        %s184 = scalar_lea.vmem [#allocation2], %s183
        // Predicated region
        $region33: #{tpu_custom_call.1} parent=31 // pred_check
          %p185 = pneg %p55
        $region34: #{tpu_custom_call.1} parent=31 // pred_check_branch
          %187 = sbr.rel (%p185) target = $region36
        $region35: #{tpu_custom_call.1} parent=31 // pred_region
          %188 = dma.done %s181, 512
        $region36: #{tpu_custom_call.1} parent=31 // pred_fallthru
          _
        %s189 = sand.u32 %s42, 1
        %s190 = scalar_lea.sflag [#allocation3], %s189
        %s191 = sand.u32 %s42, 1
        %s192 = smul.addr %s191, 32
        %s193 = scalar_lea.vmem [#allocation2], %s192
        %p194 = pneg %p55
        %p195 = pneg %p52
        %p196 = pneg %p76
        %p197 = pneg %p73
        %p198 = pneg %p97
        %p199 = pneg %p94
        %p200 = pneg %p125
        %p201 = pneg %p122
        %s202 = sand.u32 %s112, 1
        %s203 = scalar_lea.sflag [#allocation4], %s202
        %s204 = sand.u32 %s112, 1
        %s205 = smul.addr %s204, 64
        %s206 = scalar_lea.vmem [#allocation5], %s205
        %s207 = smul.u32 2, %s25
        %s208 = smul.u32 2, %s25
        %v210 = vld [vmem:[%s184] sm:$0xff]
        %v211 = vld [vmem:[%s184 + $0x8] sm:$0xff]
        %v212 = vld [vmem:[%s184 + $0x10] sm:$0xff]
        %v213 = vld [vmem:[%s184 + $0x18] sm:$0xff]
        %v214 = vpack.c.bf16 %v212, %v210
        %v215 = vpack.c.bf16 %v213, %v211
        %v216 = vld [vmem:[%s1] sm:$0xf]
        %v217 = vld [vmem:[%s1 + $0x4] sm:$0xf]
        %v218 = vld [vmem:[%s1 + $0x8] sm:$0xf]
        %v219 = vld [vmem:[%s1 + $0xc] sm:$0xf]
        %v220 = vld [vmem:[%s2] sm:$0xff]
        %v221 = vld [vmem:[%s2 + $0x8] sm:$0xff]
        %v222 = vld [vmem:[%s2 + $0x10] sm:$0xff]
        %v223 = vld [vmem:[%s2 + $0x18] sm:$0xff]
        %225 = vset.pattern.permute.xlu0 0
        %226 = vperm.xlu0 %225, %v220
        %v227 = vpop.permute.xlu0 %226
        %230 = vset.pattern.permute.xlu0 0
        %231 = vperm.xlu0 %230, %v221
        %v232 = vpop.permute.xlu0 %231
        %235 = vset.pattern.permute.xlu0 0
        %236 = vperm.xlu0 %235, %v222
        %v237 = vpop.permute.xlu0 %236
        %240 = vset.pattern.permute.xlu0 0
        %241 = vperm.xlu0 %240, %v223
        %v242 = vpop.permute.xlu0 %241
        %v248 = vunpack.c.l.b16 %v216
        %v249 = vunpack.c.l.b16 %v217
        %v250 = vunpack.c.l.b16 %v218
        %v251 = vunpack.c.l.b16 %v219
        %v252 = vpack.c.b16 %v249, %v248
        %v253 = vpack.c.b16 %v251, %v250
        %vm254 = vcmask 130048
        %v256 = vsel %vm254, %v252, 0
        %v259 = vsel %vm254, %v253, 0
        %261 = vmatprep.subr.bf16.mxu0 %v215
        %262 = vmatpush1.bf16.msra.mxu0 %v214
        %263 = vmatprep.subr.bf16.mxu0 0
        %264 = vmatpush1.bf16.msra.mxu0 0
        %265 = vmatprep.subr.bf16.mxu0 0
        %266 = vmatpush1.bf16.msra.mxu0 0
        %267 = vmatprep.subr.bf16.mxu0 0
        %268 = vmatpush1.bf16.msra.mxu0 0
        %269 = vmatprep.subr.bf16.mxu0 0
        %270 = vmatpush1.bf16.msra.mxu0 0
        %271 = vmatprep.subr.bf16.mxu0 0
        %272 = vmatpush1.bf16.msra.mxu0 0
        %273 = vmatprep.subr.bf16.mxu0 0
        %274 = vmatpush1.bf16.msra.mxu0 0
        %275 = vmatprep.subr.bf16.mxu0 0
        %276 = vmatpush1.bf16.msra.mxu0 0
        %277 = vmatprep.subr.bf16.mxu0 0
        %278 = vmatpush1.bf16.msra.mxu0 0
        %279 = vmatprep.subr.bf16.mxu0 0
        %280 = vmatpush1.bf16.msra.mxu0 0
        %281 = vmatprep.subr.bf16.mxu0 0
        %282 = vmatpush1.bf16.msra.mxu0 0
        %283 = vmatprep.subr.bf16.mxu0 0
        %284 = vmatpush1.bf16.msra.mxu0 0
        %285 = vmatprep.subr.bf16.mxu0 0
        %286 = vmatpush1.bf16.msra.mxu0 0
        %287 = vmatprep.subr.bf16.mxu0 0
        %288 = vmatpush1.bf16.msra.mxu0 0
        %289 = vmatprep.subr.bf16.mxu0 0
        %290 = vmatpush1.bf16.msra.mxu0 0
        %291 = vmatprep.subr.bf16.mxu0 0
        %292 = vmatpush1.bf16.msra.mxu0 0
        %293 = vmatprep.mubr.bf16.mxu0 0
        %294 = vmatmul.mubr.bf16.gmra.mrb[0].mxu0 %v256
        %v295 = vpop.f32.mrb[0].mxu0
        %v296 = vadd.f32 %v227, %v295
        %v297 = vpop.f32.mrb[0].mxu0
        %v298 = vadd.f32 %v227, %v297
        %v299 = vpop.f32.mrb[0].mxu0
        %v300 = vadd.f32 %v232, %v299
        %v301 = vpop.f32.mrb[0].mxu0
        %v302 = vadd.f32 %v232, %v301
        %303 = vmatprep.mubr.bf16.mxu0 0
        %304 = vmatmul.mubr.bf16.gmra.mrb[0].mxu0 %v259
        %v305 = vpop.f32.mrb[0].mxu0
        %v306 = vadd.f32 %v237, %v305
        %v307 = vpop.f32.mrb[0].mxu0
        %v308 = vadd.f32 %v237, %v307
        %v309 = vpop.f32.mrb[0].mxu0
        %v310 = vadd.f32 %v242, %v309
        %v311 = vpop.f32.mrb[0].mxu0
        %v312 = vadd.f32 %v242, %v311
        %313 = vdwg.mxu0
        %314 = vst [vmem:[%s206] sm:$0xff] %v296
        %315 = vst [vmem:[%s206 + $0x8] sm:$0xff] %v298
        %316 = vst [vmem:[%s206 + $0x10] sm:$0xff] %v300
        %317 = vst [vmem:[%s206 + $0x18] sm:$0xff] %v302
        %318 = vst [vmem:[%s206 + $0x20] sm:$0xff] %v306
        %319 = vst [vmem:[%s206 + $0x28] sm:$0xff] %v308
        %320 = vst [vmem:[%s206 + $0x30] sm:$0xff] %v310
        %321 = vst [vmem:[%s206 + $0x38] sm:$0xff] %v312
        %s322 = sand.u32 %s112, 1
        %s323 = scalar_lea.sflag [#allocation4], %s322
        %s324 = sand.u32 %s112, 1
        %s325 = smul.addr %s324, 64
        %s326 = scalar_lea.vmem [#allocation5], %s325
        // Predicated region
        $region37: #{tpu_custom_call.1} parent=31 // pred_check
          %p327 = pneg %p122
        $region38: #{tpu_custom_call.1} parent=31 // pred_check_branch
          %329 = sbr.rel (%p327) target = $region40
        $region39: #{tpu_custom_call.1} parent=31 // pred_region
          %s330 = smul.u32 2, %s25
          %s332 = ssub.s32 1024, 1024
          %333 = vsyncadd %s323, %s332
          %s334 = smul.addr %s24, 8
          %s335 = sadd.s32 %s330, %s334
          %s336 = smul.addr %s335, 128
          %s337 = scalar_lea.hbm %s3, %s336
          %s338 = sshll.u32 %s326, 4
          %s339 = int_to_ptr.vmem [resolvable:$true] %s338
          %344 = dma.vmem_to_hbm [thread:$0]  %s339, 1024, %s337, %s323, 256, 256, 16
        $region40: #{tpu_custom_call.1} parent=31 // pred_fallthru
          _
      $region32: #{tpu_custom_call.1} parent=5 // pred_fallthru
        _
      %p345 = scmp.le.s32.totalorder 2, %s15
      // Predicated region
      $region41: #{tpu_custom_call.1} parent=5 // pred_check
        %p346 = pneg %p345
      $region42: #{tpu_custom_call.1} parent=5 // pred_check_branch
        %348 = sbr.rel (%p346) target = $region44
      $region43: #{tpu_custom_call.1} parent=5 // pred_region
        %s349 = ssub.s32 %s15, 2
        // Predicated region
        $region45: #{tpu_custom_call.1} parent=43 // pred_check
          %p350 = pneg %p128
        $region46: #{tpu_custom_call.1} parent=43 // pred_check_branch
          %352 = sbr.rel (%p350) target = $region48
        $region47: #{tpu_custom_call.1} parent=43 // pred_region
          %s353 = sand.u32 %s113, 1
          %s354 = scalar_lea.sflag [#allocation4], %s353
          %s355 = sand.u32 %s113, 1
          %s356 = smul.addr %s355, 64
          %s357 = scalar_lea.vmem [#allocation5], %s356
          %358 = dma.done %s354, 1024
        $region48: #{tpu_custom_call.1} parent=43 // pred_fallthru
          _
      $region44: #{tpu_custom_call.1} parent=5 // pred_fallthru
        _
    $region6: #{tpu_custom_call.1} parent=1 // loop_footer
      %s19 = sadd.s32 1, %s15
    $region7: #{tpu_custom_call.1} parent=1 // loop_footer_branch
      %14 = sbr.rel target = $region3
    $region8: #{tpu_custom_call.1} parent=1 // loop_exit
      _
    %359 = vsyncpa [#allocation3], 1
    %s360 = scalar_lea.sflag [#allocation3], 1
    %361 = vsyncpa %s360, 1
    %362 = vsyncpa [#allocation4], 1
    %s363 = scalar_lea.sflag [#allocation4], 1
    %364 = vsyncpa %s363, 1

</llo_original>
